<compile_context>
chip_gen: v7x
topology: tpu7x:2x2x1
jax: 0.10.0
libtpu: 0.0.40
codegen_flags: <defaults>
</compile_context>

<pallas_src>
import jax
import jax.numpy as jnp
from jax.experimental import pallas as pl
from jax.experimental.pallas import tpu as pltpu


def _make_kernel(n_pad, H, W):
    Wo = W + 2 * n_pad

    def kernel(x_ref, o_ref):
        x = x_ref[...]                                        # (tbc, H, W)
        # Zero rows along H (top and bottom n_pad rows) -- small masked stores.
        zrows = jnp.zeros((x.shape[0], n_pad, Wo), dtype=x.dtype)
        o_ref[:, 0:n_pad, :] = zrows
        o_ref[:, n_pad + H:n_pad + H + n_pad, :] = zrows
        # Center block and the two circular wrap slabs, written directly into
        # the output tile (no (tbc, Ho, Wo) concat temp).
        o_ref[:, n_pad:n_pad + H, n_pad:n_pad + W] = x
        o_ref[:, n_pad:n_pad + H, 0:n_pad] = x[:, :, W - n_pad:]
        o_ref[:, n_pad:n_pad + H, n_pad + W:n_pad + W + n_pad] = x[:, :, 0:n_pad]

    return kernel


def _vmem_plan():
    """Return (physical_vmem, vmem_limit_bytes, per-step tile budget)."""
    try:
        phys = int(pltpu.get_tpu_info().vmem_capacity_bytes)
    except Exception:
        phys = 64 << 20
    # 64 MiB limit on 128-MiB chips (v5e/v6e), 32 MiB on 64-MiB chips (v7x).
    limit = min(phys // 2, 64 << 20)
    budget = (limit * 3) // 4          # leave headroom under the requested limit
    return phys, limit, budget


def _num_tensorcores():
    try:
        n = getattr(pltpu.get_tpu_info(), "num_cores", None)
        if n:
            return max(1, int(n))
    except Exception:
        pass
    try:
        return max(1, int(getattr(jax.devices()[0], "num_cores", 1)))
    except Exception:
        return 1


def periodic_padding(x, n_pad, *, _max_tbc=None):
    """Pallas equivalent of PeriodicPadding(n_pad).forward(x) for NCHW x."""
    B, C, H, W = x.shape
    if n_pad == 0:
        return x
    # wrap slices assume 0 < n_pad < W (same restriction as torch circular pad)
    assert 0 < n_pad < W, "periodic_padding requires 0 < n_pad < W"

    Ho, Wo = H + 2 * n_pad, W + 2 * n_pad
    BC = B * C
    xf = x.reshape(BC, H, W)                       # free layout change

    itemsize = jnp.dtype(x.dtype).itemsize
    phys, vmem_limit, budget = _vmem_plan()
    # Per leading-axis unit: double-buffered input + output slab.
    per_unit = 2 * (H * W + Ho * Wo) * itemsize

    if per_unit > budget:
        # Even a single (1, H, W) slab exceeds the budget: run tbc=1 with a
        # raised VMEM limit.
        # TODO(synk): add an H-tiling grid axis (zero rows emitted via pl.when
        # on the first/last H block) for very high-resolution inputs.
        tbc = 1
        vmem_limit = int(min(phys, per_unit + (8 << 20)))
    else:
        tbc = max(1, min(BC, budget // per_unit))
        ncores = _num_tensorcores()
        if ncores > 1 and BC > 1:
            # >= 2 grid steps per TensorCore (v7x) so prefetch/writeback of
            # neighbouring steps overlaps compute on each core.
            tbc = min(tbc, max(1, pl.cdiv(BC, 2 * ncores)))

    if _max_tbc is not None:
        tbc = min(tbc, _max_tbc)

    # Ragged grid: Pallas masks the out-of-bounds part of the last block.
    grid = (pl.cdiv(BC, tbc),)

    # TODO(synk): if production keeps Wo << 128 and the downstream conv can
    # consume channels-last, a lane-dense layout (C on the lane axis) would
    # turn the masked vst.msk stores into full-width stores.

    out = pl.pallas_call(
        _make_kernel(n_pad, H, W),
        out_shape=jax.ShapeDtypeStruct((BC, Ho, Wo), x.dtype),
        grid=grid,
        in_specs=[pl.BlockSpec((tbc, H, W), lambda i: (i, 0, 0))],
        out_specs=pl.BlockSpec((tbc, Ho, Wo), lambda i: (i, 0, 0)),
        compiler_params=pltpu.CompilerParams(
            dimension_semantics=("parallel",),
            vmem_limit_bytes=int(vmem_limit),
        ),
    )(xf)
    return out.reshape(B, C, Ho, Wo)


def periodic_padding_ref(x, n_pad):
    """Pure-JAX reference matching the PyTorch module semantics."""
    x = jnp.pad(x, ((0, 0), (0, 0), (0, 0), (n_pad, n_pad)), mode="wrap")
    x = jnp.pad(x, ((0, 0), (0, 0), (n_pad, n_pad), (0, 0)),
                mode="constant", constant_values=0)
    return x


if __name__ == "__main__":
    key = jax.random.PRNGKey(0)

    # Main test: small module-consistent shape.
    n_pad = 2
    B, C, H, W = 2, 4, 16, 16
    x = jax.random.normal(key, (B, C, H, W), dtype=jnp.float32)
    out = jax.block_until_ready(periodic_padding(x, n_pad))
    ref = periodic_padding_ref(x, n_pad)
    assert out.shape == (B, C, H + 2 * n_pad, W + 2 * n_pad), out.shape
    assert out.dtype == x.dtype
    assert jnp.array_equal(out, ref), "mismatch vs reference"

    # Ragged-grid test: BC=7 with tbc capped at 3 -> 3 grid steps with a
    # partial last block (verifies masked out-of-bounds output writeback).
    x2 = jax.random.normal(jax.random.PRNGKey(0), (1, 7, 16, 16), dtype=jnp.float32)
    out2 = jax.block_until_ready(periodic_padding(x2, 1, _max_tbc=3))
    ref2 = periodic_padding_ref(x2, 1)
    assert jnp.array_equal(out2, ref2), "mismatch vs reference (ragged grid)"

    print("KERNEL_OK")
</pallas_src>

<mosaic_0001>
module attributes {stable_mosaic.version = 11 : i64} {
  func.func @kernel(%arg0: i32, %arg1: memref<8x16x16xf32, #tpu.memory_space<vmem>>, %arg2: memref<8x20x20xf32, #tpu.memory_space<vmem>>) attributes {dimension_semantics = [#tpu.dimension_semantics<parallel>], iteration_bounds = array<i64: 1>, scalar_prefetch = 0 : i64, scratch_operands = 0 : i64, tpu.core_type = #tpu.core_type<tc>, window_params = [{transform_indices = @transform_0, window_bounds = array<i64: 8, 16, 16>}, {transform_indices = @transform_1, window_bounds = array<i64: 8, 20, 20>}]} {
    %c0 = arith.constant 0 : index
    %c0_0 = arith.constant 0 : index
    %c0_1 = arith.constant 0 : index
    %0 = vector.load %arg1[%c0, %c0_0, %c0_1] : memref<8x16x16xf32, #tpu.memory_space<vmem>>, vector<8x16x16xf32>
    %cst = arith.constant 0.000000e+00 : f32
    %1 = vector.broadcast %cst : f32 to vector<8x2x20xf32>
    %c0_2 = arith.constant 0 : index
    %c0_3 = arith.constant 0 : index
    %c0_4 = arith.constant 0 : index
    %2 = vector.load %arg2[%c0_2, %c0_3, %c0_4] : memref<8x20x20xf32, #tpu.memory_space<vmem>>, vector<8x2x20xf32>
    tpu.vector_store %arg2[%c0_2, %c0_3, %c0_4], %1 {strides = array<i32>} : memref<8x20x20xf32, #tpu.memory_space<vmem>>, vector<8x2x20xf32>,
    %c0_5 = arith.constant 0 : index
    %c18 = arith.constant 18 : index
    %c0_6 = arith.constant 0 : index
    %3 = vector.load %arg2[%c0_5, %c18, %c0_6] : memref<8x20x20xf32, #tpu.memory_space<vmem>>, vector<8x2x20xf32>
    tpu.vector_store %arg2[%c0_5, %c18, %c0_6], %1 {strides = array<i32>} : memref<8x20x20xf32, #tpu.memory_space<vmem>>, vector<8x2x20xf32>,
    %c0_7 = arith.constant 0 : index
    %c2 = arith.constant 2 : index
    %c2_8 = arith.constant 2 : index
    %4 = vector.load %arg2[%c0_7, %c2, %c2_8] : memref<8x20x20xf32, #tpu.memory_space<vmem>>, vector<8x16x16xf32>
    tpu.vector_store %arg2[%c0_7, %c2, %c2_8], %0 {strides = array<i32>} : memref<8x20x20xf32, #tpu.memory_space<vmem>>, vector<8x16x16xf32>,
    %5 = vector.extract_strided_slice %0 {offsets = [0, 0, 14], sizes = [8, 16, 2], strides = [1, 1, 1]} : vector<8x16x16xf32> to vector<8x16x2xf32>
    %c0_9 = arith.constant 0 : index
    %c2_10 = arith.constant 2 : index
    %c0_11 = arith.constant 0 : index
    %6 = vector.load %arg2[%c0_9, %c2_10, %c0_11] : memref<8x20x20xf32, #tpu.memory_space<vmem>>, vector<8x16x2xf32>
    tpu.vector_store %arg2[%c0_9, %c2_10, %c0_11], %5 {strides = array<i32>} : memref<8x20x20xf32, #tpu.memory_space<vmem>>, vector<8x16x2xf32>,
    %7 = vector.extract_strided_slice %0 {offsets = [0, 0, 0], sizes = [8, 16, 2], strides = [1, 1, 1]} : vector<8x16x16xf32> to vector<8x16x2xf32>
    %c0_12 = arith.constant 0 : index
    %c2_13 = arith.constant 2 : index
    %c18_14 = arith.constant 18 : index
    %8 = vector.load %arg2[%c0_12, %c2_13, %c18_14] : memref<8x20x20xf32, #tpu.memory_space<vmem>>, vector<8x16x2xf32>
    tpu.vector_store %arg2[%c0_12, %c2_13, %c18_14], %7 {strides = array<i32>} : memref<8x20x20xf32, #tpu.memory_space<vmem>>, vector<8x16x2xf32>,
    return
  }
  func.func @transform_0(%arg0: i32) -> (i32, i32, i32) {
    %c0_i32 = arith.constant 0 : i32
    %c0_i32_0 = arith.constant 0 : i32
    %c0_i32_1 = arith.constant 0 : i32
    return %arg0, %c0_i32, %c0_i32_0 : i32, i32, i32
  }
  func.func @transform_1(%arg0: i32) -> (i32, i32, i32) {
    %c0_i32 = arith.constant 0 : i32
    %c0_i32_0 = arith.constant 0 : i32
    %c0_i32_1 = arith.constant 0 : i32
    return %arg0, %c0_i32, %c0_i32_0 : i32, i32, i32
  }
}

</mosaic_0001>

<llo_original>
// kernel: tpu_custom_call.1
$region0: #{tpu_custom_call.1}
  #allocation0 [shape = 'u32[]', space=smem, size = 0x4, offset = 0x4, fixed_abs, tag = 'smem constant byte address 0x4 - core index']
  #allocation1 [shape = 'u32[144,128]{1,0:T(1,128)}', space=vmem, size = 0x12000, scoped, tag = 'internal scratch']
  %s0 = inlined_call_operand.hbm [shape: f32[8,16,16], index: 0, kind: input, shape index: {}]
  %s1 = inlined_call_operand.vmem [shape: f32[8,20,20], index: 1, kind: output, shape index: {}]
  %s2 = sld [smem:[#allocation0]]
  $region18: #{tpu_custom_call.1} parent=0
    _
  %s4 = ssub.s32 1, %s2
  %s5 = scalar_select 0, %s4, %s2
  $region1: #{tpu_custom_call.1} parent=0
    #allocation2 [shape = 'u8[65536]{0}', space=vmem, size = 0x10000, scoped, tag = 'input window, operand 0, single buffered']
    #allocation3 [shape = 's32[1]{0}', space=sflag, size = 0x4, scoped, tag = 'scoped memory for tpu_custom_call.1']
    %6 = vsyncpa [#allocation3], 0
    // Predicated region
    $region2: #{tpu_custom_call.1} parent=1 // pred_check
      _
    $region3: #{tpu_custom_call.1} parent=1 // pred_check_branch
      %8 = sbr.rel (0) target = $region5
    $region4: #{tpu_custom_call.1} parent=1 // pred_region
      %s10 = ssub.s32 2048, 2048
      %11 = vsyncadd [#allocation3], %s10
      %s12 = sshll.u32 [#allocation2], 4
      %s13 = int_to_ptr.vmem [resolvable:$true] %s12
      %18 = dma.hbm_to_vmem [thread:$0]  %s0, 2048, %s13, [#allocation3], 128, 128, 8
    $region5: #{tpu_custom_call.1} parent=1 // pred_fallthru
      _
    // Predicated region
    $region6: #{tpu_custom_call.1} parent=1 // pred_check
      _
    $region7: #{tpu_custom_call.1} parent=1 // pred_check_branch
      %20 = sbr.rel (0) target = $region9
    $region8: #{tpu_custom_call.1} parent=1 // pred_region
      %21 = dma.done [#allocation3], 2048
    $region9: #{tpu_custom_call.1} parent=1 // pred_fallthru
      _
    %v22 = vld [vmem:[#allocation2] sm:$0xff]
    %v23 = vld [vmem:[#allocation2 + $0x8] sm:$0xff]
    %v24 = vld [vmem:[#allocation2 + $0x10] sm:$0xff]
    %v25 = vld [vmem:[#allocation2 + $0x18] sm:$0xff]
    %v26 = vld [vmem:[#allocation2 + $0x20] sm:$0xff]
    %v27 = vld [vmem:[#allocation2 + $0x28] sm:$0xff]
    %v28 = vld [vmem:[#allocation2 + $0x30] sm:$0xff]
    %v29 = vld [vmem:[#allocation2 + $0x38] sm:$0xff]
    %v30 = vld [vmem:[#allocation2 + $0x40] sm:$0xff]
    %v31 = vld [vmem:[#allocation2 + $0x48] sm:$0xff]
    %v32 = vld [vmem:[#allocation2 + $0x50] sm:$0xff]
    %v33 = vld [vmem:[#allocation2 + $0x58] sm:$0xff]
    %v34 = vld [vmem:[#allocation2 + $0x60] sm:$0xff]
    %v35 = vld [vmem:[#allocation2 + $0x68] sm:$0xff]
    %v36 = vld [vmem:[#allocation2 + $0x70] sm:$0xff]
    %v37 = vld [vmem:[#allocation2 + $0x78] sm:$0xff]
    %vm38 = vcmask 156672
    %39 = vst.msk [vmem:[%s1] sm:$0x3] %vm38, 0.0
    %40 = vst.msk [vmem:[%s1 + $0x18] sm:$0x3] %vm38, 0.0
    %41 = vst.msk [vmem:[%s1 + $0x30] sm:$0x3] %vm38, 0.0
    %42 = vst.msk [vmem:[%s1 + $0x48] sm:$0x3] %vm38, 0.0
    %43 = vst.msk [vmem:[%s1 + $0x60] sm:$0x3] %vm38, 0.0
    %44 = vst.msk [vmem:[%s1 + $0x78] sm:$0x3] %vm38, 0.0
    %45 = vst.msk [vmem:[%s1 + $0x90] sm:$0x3] %vm38, 0.0
    %46 = vst.msk [vmem:[%s1 + $0xa8] sm:$0x3] %vm38, 0.0
    %47 = vst.msk [vmem:[%s1 + $0x12] sm:$0x3] %vm38, 0.0
    %48 = vst.msk [vmem:[%s1 + $0x2a] sm:$0x3] %vm38, 0.0
    %49 = vst.msk [vmem:[%s1 + $0x42] sm:$0x3] %vm38, 0.0
    %50 = vst.msk [vmem:[%s1 + $0x5a] sm:$0x3] %vm38, 0.0
    %51 = vst.msk [vmem:[%s1 + $0x72] sm:$0x3] %vm38, 0.0
    %52 = vst.msk [vmem:[%s1 + $0x8a] sm:$0x3] %vm38, 0.0
    %53 = vst.msk [vmem:[%s1 + $0xa2] sm:$0x3] %vm38, 0.0
    %54 = vst.msk [vmem:[%s1 + $0xba] sm:$0x3] %vm38, 0.0
    %71 = vrot.lane.b32.xlu0 %v22, 2
    %v72 = vpop.permute.xlu0 %71
    %73 = vrot.lane.b32.xlu0 %v23, 2
    %v74 = vpop.permute.xlu0 %73
    %75 = vrot.lane.b32.xlu0 %v24, 2
    %v76 = vpop.permute.xlu0 %75
    %77 = vrot.lane.b32.xlu0 %v25, 2
    %v78 = vpop.permute.xlu0 %77
    %79 = vrot.lane.b32.xlu0 %v26, 2
    %v80 = vpop.permute.xlu0 %79
    %81 = vrot.lane.b32.xlu0 %v27, 2
    %v82 = vpop.permute.xlu0 %81
    %83 = vrot.lane.b32.xlu0 %v28, 2
    %v84 = vpop.permute.xlu0 %83
    %85 = vrot.lane.b32.xlu0 %v29, 2
    %v86 = vpop.permute.xlu0 %85
    %87 = vrot.lane.b32.xlu0 %v30, 2
    %v88 = vpop.permute.xlu0 %87
    %89 = vrot.lane.b32.xlu0 %v31, 2
    %v90 = vpop.permute.xlu0 %89
    %91 = vrot.lane.b32.xlu0 %v32, 2
    %v92 = vpop.permute.xlu0 %91
    %93 = vrot.lane.b32.xlu0 %v33, 2
    %v94 = vpop.permute.xlu0 %93
    %95 = vrot.lane.b32.xlu0 %v34, 2
    %v96 = vpop.permute.xlu0 %95
    %97 = vrot.lane.b32.xlu0 %v35, 2
    %v98 = vpop.permute.xlu0 %97
    %99 = vrot.lane.b32.xlu0 %v36, 2
    %v100 = vpop.permute.xlu0 %99
    %101 = vrot.lane.b32.xlu0 %v37, 2
    %v102 = vpop.permute.xlu0 %101
    %vm119 = vcmask 146448
    %120 = vst.msk [vmem:[%s1 + $0x2] sm:$0xff] %vm119, %v72
    %121 = vst.msk [vmem:[%s1 + $0xa] sm:$0xff] %vm119, %v74
    %122 = vst.msk [vmem:[%s1 + $0x1a] sm:$0xff] %vm119, %v76
    %123 = vst.msk [vmem:[%s1 + $0x22] sm:$0xff] %vm119, %v78
    %124 = vst.msk [vmem:[%s1 + $0x32] sm:$0xff] %vm119, %v80
    %125 = vst.msk [vmem:[%s1 + $0x3a] sm:$0xff] %vm119, %v82
    %126 = vst.msk [vmem:[%s1 + $0x4a] sm:$0xff] %vm119, %v84
    %127 = vst.msk [vmem:[%s1 + $0x52] sm:$0xff] %vm119, %v86
    %128 = vst.msk [vmem:[%s1 + $0x62] sm:$0xff] %vm119, %v88
    %129 = vst.msk [vmem:[%s1 + $0x6a] sm:$0xff] %vm119, %v90
    %130 = vst.msk [vmem:[%s1 + $0x7a] sm:$0xff] %vm119, %v92
    %131 = vst.msk [vmem:[%s1 + $0x82] sm:$0xff] %vm119, %v94
    %132 = vst.msk [vmem:[%s1 + $0x92] sm:$0xff] %vm119, %v96
    %133 = vst.msk [vmem:[%s1 + $0x9a] sm:$0xff] %vm119, %v98
    %134 = vst.msk [vmem:[%s1 + $0xaa] sm:$0xff] %vm119, %v100
    %135 = vst.msk [vmem:[%s1 + $0xb2] sm:$0xff] %vm119, %v102
    %136 = vrot.lane.b32.xlu0 %v22, 114
    %v137 = vpop.permute.xlu0 %136
    %138 = vrot.lane.b32.xlu0 %v23, 114
    %v139 = vpop.permute.xlu0 %138
    %140 = vrot.lane.b32.xlu0 %v24, 114
    %v141 = vpop.permute.xlu0 %140
    %142 = vrot.lane.b32.xlu0 %v25, 114
    %v143 = vpop.permute.xlu0 %142
    %144 = vrot.lane.b32.xlu0 %v26, 114
    %v145 = vpop.permute.xlu0 %144
    %146 = vrot.lane.b32.xlu0 %v27, 114
    %v147 = vpop.permute.xlu0 %146
    %148 = vrot.lane.b32.xlu0 %v28, 114
    %v149 = vpop.permute.xlu0 %148
    %150 = vrot.lane.b32.xlu0 %v29, 114
    %v151 = vpop.permute.xlu0 %150
    %152 = vrot.lane.b32.xlu0 %v30, 114
    %v153 = vpop.permute.xlu0 %152
    %154 = vrot.lane.b32.xlu0 %v31, 114
    %v155 = vpop.permute.xlu0 %154
    %156 = vrot.lane.b32.xlu0 %v32, 114
    %v157 = vpop.permute.xlu0 %156
    %158 = vrot.lane.b32.xlu0 %v33, 114
    %v159 = vpop.permute.xlu0 %158
    %160 = vrot.lane.b32.xlu0 %v34, 114
    %v161 = vpop.permute.xlu0 %160
    %162 = vrot.lane.b32.xlu0 %v35, 114
    %v163 = vpop.permute.xlu0 %162
    %164 = vrot.lane.b32.xlu0 %v36, 114
    %v165 = vpop.permute.xlu0 %164
    %166 = vrot.lane.b32.xlu0 %v37, 114
    %v167 = vpop.permute.xlu0 %166
    %vm184 = vcmask 15360
    %185 = vst.msk [vmem:[%s1 + $0x2] sm:$0xff] %vm184, %v137
    %186 = vst.msk [vmem:[%s1 + $0xa] sm:$0xff] %vm184, %v139
    %187 = vst.msk [vmem:[%s1 + $0x1a] sm:$0xff] %vm184, %v141
    %188 = vst.msk [vmem:[%s1 + $0x22] sm:$0xff] %vm184, %v143
    %189 = vst.msk [vmem:[%s1 + $0x32] sm:$0xff] %vm184, %v145
    %190 = vst.msk [vmem:[%s1 + $0x3a] sm:$0xff] %vm184, %v147
    %191 = vst.msk [vmem:[%s1 + $0x4a] sm:$0xff] %vm184, %v149
    %192 = vst.msk [vmem:[%s1 + $0x52] sm:$0xff] %vm184, %v151
    %193 = vst.msk [vmem:[%s1 + $0x62] sm:$0xff] %vm184, %v153
    %194 = vst.msk [vmem:[%s1 + $0x6a] sm:$0xff] %vm184, %v155
    %195 = vst.msk [vmem:[%s1 + $0x7a] sm:$0xff] %vm184, %v157
    %196 = vst.msk [vmem:[%s1 + $0x82] sm:$0xff] %vm184, %v159
    %197 = vst.msk [vmem:[%s1 + $0x92] sm:$0xff] %vm184, %v161
    %198 = vst.msk [vmem:[%s1 + $0x9a] sm:$0xff] %vm184, %v163
    %199 = vst.msk [vmem:[%s1 + $0xaa] sm:$0xff] %vm184, %v165
    %200 = vst.msk [vmem:[%s1 + $0xb2] sm:$0xff] %vm184, %v167
    %201 = vrot.lane.b32.xlu0 %v22, 18
    %v202 = vpop.permute.xlu0 %201
    %203 = vrot.lane.b32.xlu0 %v23, 18
    %v204 = vpop.permute.xlu0 %203
    %205 = vrot.lane.b32.xlu0 %v24, 18
    %v206 = vpop.permute.xlu0 %205
    %207 = vrot.lane.b32.xlu0 %v25, 18
    %v208 = vpop.permute.xlu0 %207
    %209 = vrot.lane.b32.xlu0 %v26, 18
    %v210 = vpop.permute.xlu0 %209
    %211 = vrot.lane.b32.xlu0 %v27, 18
    %v212 = vpop.permute.xlu0 %211
    %213 = vrot.lane.b32.xlu0 %v28, 18
    %v214 = vpop.permute.xlu0 %213
    %215 = vrot.lane.b32.xlu0 %v29, 18
    %v216 = vpop.permute.xlu0 %215
    %217 = vrot.lane.b32.xlu0 %v30, 18
    %v218 = vpop.permute.xlu0 %217
    %219 = vrot.lane.b32.xlu0 %v31, 18
    %v220 = vpop.permute.xlu0 %219
    %221 = vrot.lane.b32.xlu0 %v32, 18
    %v222 = vpop.permute.xlu0 %221
    %223 = vrot.lane.b32.xlu0 %v33, 18
    %v224 = vpop.permute.xlu0 %223
    %225 = vrot.lane.b32.xlu0 %v34, 18
    %v226 = vpop.permute.xlu0 %225
    %227 = vrot.lane.b32.xlu0 %v35, 18
    %v228 = vpop.permute.xlu0 %227
    %229 = vrot.lane.b32.xlu0 %v36, 18
    %v230 = vpop.permute.xlu0 %229
    %231 = vrot.lane.b32.xlu0 %v37, 18
    %v232 = vpop.permute.xlu0 %231
    %vm249 = vcmask 162960
    %250 = vst.msk [vmem:[%s1 + $0x2] sm:$0xff] %vm249, %v202
    %251 = vst.msk [vmem:[%s1 + $0xa] sm:$0xff] %vm249, %v204
    %252 = vst.msk [vmem:[%s1 + $0x1a] sm:$0xff] %vm249, %v206
    %253 = vst.msk [vmem:[%s1 + $0x22] sm:$0xff] %vm249, %v208
    %254 = vst.msk [vmem:[%s1 + $0x32] sm:$0xff] %vm249, %v210
    %255 = vst.msk [vmem:[%s1 + $0x3a] sm:$0xff] %vm249, %v212
    %256 = vst.msk [vmem:[%s1 + $0x4a] sm:$0xff] %vm249, %v214
    %257 = vst.msk [vmem:[%s1 + $0x52] sm:$0xff] %vm249, %v216
    %258 = vst.msk [vmem:[%s1 + $0x62] sm:$0xff] %vm249, %v218
    %259 = vst.msk [vmem:[%s1 + $0x6a] sm:$0xff] %vm249, %v220
    %260 = vst.msk [vmem:[%s1 + $0x7a] sm:$0xff] %vm249, %v222
    %261 = vst.msk [vmem:[%s1 + $0x82] sm:$0xff] %vm249, %v224
    %262 = vst.msk [vmem:[%s1 + $0x92] sm:$0xff] %vm249, %v226
    %263 = vst.msk [vmem:[%s1 + $0x9a] sm:$0xff] %vm249, %v228
    %264 = vst.msk [vmem:[%s1 + $0xaa] sm:$0xff] %vm249, %v230
    %265 = vst.msk [vmem:[%s1 + $0xb2] sm:$0xff] %vm249, %v232
    // Predicated region
    $region10: #{tpu_custom_call.1} parent=1 // pred_check
      _
    $region11: #{tpu_custom_call.1} parent=1 // pred_check_branch
      %267 = sbr.rel (0) target = $region13
    $region12: #{tpu_custom_call.1} parent=1 // pred_region
      _
    $region13: #{tpu_custom_call.1} parent=1 // pred_fallthru
      _
    // Predicated region
    $region14: #{tpu_custom_call.1} parent=1 // pred_check
      _
    $region15: #{tpu_custom_call.1} parent=1 // pred_check_branch
      %269 = sbr.rel (0) target = $region17
    $region16: #{tpu_custom_call.1} parent=1 // pred_region
      _
    $region17: #{tpu_custom_call.1} parent=1 // pred_fallthru
      _
    %270 = vsyncpa [#allocation3], 1

</llo_original>
